<compile_context>
chip_gen: v7x
topology: tpu7x:2x2x1
jax: 0.10.0
libtpu: 0.0.40
codegen_flags: <defaults>
</compile_context>

<pallas_src>
import jax
import jax.numpy as jnp
from jax.experimental import pallas as pl
from jax.experimental.pallas import tpu as pltpu

TRF_SIZE = 81
LATENT_DIM = 1
COND_DIM = 1
H1 = TRF_SIZE // 16   # 5
H2 = TRF_SIZE // 4    # 20
H3 = TRF_SIZE         # 81
IN1 = LATENT_DIM + COND_DIM  # 2

# packed-output lane layout: [ d1 (5) | d2 (20) | d3 (81) | zero pad (22) ] = 128 lanes
OFF1, OFF2, OFF3 = 0, H1, H1 + H2
PACKED_W = ((H1 + H2 + H3 + 127) // 128) * 128   # 128

# Default batch tile. Sweep 4096-16384 on v5e/v6e; keep <= 8192 on v7x (64 MiB VMEM).
DEFAULT_BATCH_TILE = 8192


def _silu(x):
    return x * jax.nn.sigmoid(x)


def _decoder_kernel(
    x1_ref, x2_ref, x3c_ref,
    w1_ref, b1_ref,
    w2a_ref, w2b_ref, b2_ref,
    w3a_ref, w3b_ref, b3_ref,
    p1_ref, p2_ref,
    out_ref,
):
    f32 = jnp.float32
    # Streamed activations arrive in io_dtype (bf16 by default); compute in f32.
    x1 = x1_ref[...].astype(f32)      # (TB, 20)
    x2 = x2_ref[...].astype(f32)      # (TB, 5)
    x3c = x3c_ref[...].astype(f32)    # (TB, 2) = [x3 | cond]

    # fc1: cat([x3, cond]) @ W1 + b1  (single K=2 MXU dot)
    d1 = _silu(jnp.dot(x3c, w1_ref[...], preferred_element_type=f32) + b1_ref[...])

    # fc2: cat([d1, x2]) @ W2 + b2 == d1 @ W2[:H1] + x2 @ W2[H1:] + b2  (exact split)
    d2 = _silu(jnp.dot(d1, w2a_ref[...], preferred_element_type=f32)
               + jnp.dot(x2, w2b_ref[...], preferred_element_type=f32)
               + b2_ref[...])

    # fc3 with its output columns pre-placed at lanes [OFF3, OFF3+H3) of the packed slab.
    d3_pk = (jnp.dot(d2, w3a_ref[...], preferred_element_type=f32)
             + jnp.dot(x1, w3b_ref[...], preferred_element_type=f32)
             + b3_ref[...])                                    # (TB, 128)

    # Place d1 / d2 into their lanes via 0/1 selection matmuls (exact; avoids any
    # narrow / unaligned stores) and emit one lane-dense 128-wide store.
    packed = (jnp.dot(d1, p1_ref[...], preferred_element_type=f32)
              + jnp.dot(d2, p2_ref[...], preferred_element_type=f32)
              + d3_pk)
    out_ref[...] = packed.astype(out_ref.dtype)


def pixel_dem_decoder(x1, x2, x3, cond_scalar, params, *,
                      batch_tile=DEFAULT_BATCH_TILE, io_dtype=jnp.bfloat16):
    """x1:(B,20) x2:(B,5) x3:(B,1) cond:(B,1). Returns (d1, d2, d3) in io_dtype."""
    B = x1.shape[0]
    f32 = jnp.float32
    w1, b1, w2, b2, w3, b3 = (params[k] for k in ("w1", "b1", "w2", "b2", "w3", "b3"))

    # Split W2 / W3 to mirror the feature-axis concatenations exactly.
    w2a, w2b = w2[:H1, :], w2[H1:, :]            # (5,20), (5,20)
    w3a, w3b = w3[:H2, :], w3[H2:, :]            # (20,81), (20,81)

    # Pre-place fc3 weights/bias into packed lanes [OFF3, OFF3+H3); zero elsewhere.
    pad3 = ((0, 0), (OFF3, PACKED_W - OFF3 - H3))
    w3a_pk = jnp.pad(w3a.astype(f32), pad3)      # (20, 128)
    w3b_pk = jnp.pad(w3b.astype(f32), pad3)      # (20, 128)
    b3_pk = jnp.pad(b3.reshape(1, H3).astype(f32), pad3)   # (1, 128)

    # 0/1 selection matrices placing d1 at lanes [0,5) and d2 at lanes [5,25).
    p1 = jnp.eye(H1, PACKED_W, k=OFF1, dtype=f32)           # (5, 128)
    p2 = jnp.eye(H2, PACKED_W, k=OFF2, dtype=f32)           # (20, 128)

    # One input stream for [x3 | cond]; stream activations in io_dtype.
    x3c = jnp.concatenate([x3, cond_scalar], axis=1)         # (B, 2)
    x1s = x1.astype(io_dtype)
    x2s = x2.astype(io_dtype)
    x3cs = x3c.astype(io_dtype)

    tb = min(int(batch_tile), B)
    grid = (pl.cdiv(B, tb),)

    def batch_spec(feat):
        return pl.BlockSpec((tb, feat), lambda i: (i, 0))

    def resident_spec(shape):
        return pl.BlockSpec(shape, lambda i: (0, 0))

    packed = pl.pallas_call(
        _decoder_kernel,
        grid=grid,
        out_shape=jax.ShapeDtypeStruct((B, PACKED_W), io_dtype),
        in_specs=[
            batch_spec(H2), batch_spec(H1), batch_spec(IN1),
            resident_spec(w1.shape), resident_spec((1, H1)),
            resident_spec(w2a.shape), resident_spec(w2b.shape), resident_spec((1, H2)),
            resident_spec(w3a_pk.shape), resident_spec(w3b_pk.shape),
            resident_spec((1, PACKED_W)),
            resident_spec(p1.shape), resident_spec(p2.shape),
        ],
        out_specs=batch_spec(PACKED_W),
        compiler_params=pltpu.CompilerParams(dimension_semantics=("parallel",)),
    )(
        x1s, x2s, x3cs,
        w1.astype(f32), b1.reshape(1, H1).astype(f32),
        w2a.astype(f32), w2b.astype(f32), b2.reshape(1, H2).astype(f32),
        w3a_pk, w3b_pk, b3_pk,
        p1, p2,
    )

    # Slice the packed slab back into (d1, d2, d3). Downstream consumers that can accept
    # the packed layout directly should use `packed` itself to avoid the extra HBM pass.
    d1 = packed[:, OFF1:OFF1 + H1]
    d2 = packed[:, OFF2:OFF2 + H2]
    d3 = packed[:, OFF3:OFF3 + H3]
    return d1, d2, d3


def init_params(key):
    """Deterministic synthetic parameters; weights stored (in_features, out_features)."""
    ks = jax.random.split(key, 6)

    def linear(kw, kb, fan_in, fan_out):
        bound = 1.0 / jnp.sqrt(fan_in)
        w = jax.random.uniform(kw, (fan_in, fan_out), jnp.float32, -bound, bound)
        b = jax.random.uniform(kb, (fan_out,), jnp.float32, -bound, bound)
        return w, b

    w1, b1 = linear(ks[0], ks[1], COND_DIM + LATENT_DIM, H1)   # (2, 5)
    w2, b2 = linear(ks[2], ks[3], H1 + H1, H2)                 # (10, 20)
    w3, b3 = linear(ks[4], ks[5], H2 + H2, H3)                 # (40, 81)
    return {"w1": w1, "b1": b1, "w2": w2, "b2": b2, "w3": w3, "b3": b3}


def reference_forward(x1, x2, x3, cond_scalar, params):
    """Pure-JAX reference matching the PyTorch forward exactly (f32)."""
    concat = jnp.concatenate([x3, cond_scalar], axis=1)
    d1 = _silu(concat @ params["w1"] + params["b1"])
    d2 = _silu(jnp.concatenate([d1, x2], axis=1) @ params["w2"] + params["b2"])
    d3 = jnp.concatenate([d2, x1], axis=1) @ params["w3"] + params["b3"]
    return d1, d2, d3


if __name__ == "__main__":
    key = jax.random.PRNGKey(0)
    kp, k1, k2, k3, k4 = jax.random.split(key, 5)

    B = 8
    params = init_params(kp)
    x1 = jax.random.normal(k1, (B, H2), jnp.float32)                 # (8, 20)
    x2 = jax.random.normal(k2, (B, H1), jnp.float32)                 # (8, 5)
    x3 = jax.random.normal(k3, (B, LATENT_DIM), jnp.float32)         # (8, 1)
    cond_scalar = jax.random.normal(k4, (B, COND_DIM), jnp.float32)  # (8, 1)

    r1, r2, r3 = reference_forward(x1, x2, x3, cond_scalar, params)

    # Default fast path: bf16 streamed I/O, f32 compute inside the kernel.
    d1, d2, d3 = jax.block_until_ready(
        pixel_dem_decoder(x1, x2, x3, cond_scalar, params)
    )
    assert d1.shape == (B, H1) and d2.shape == (B, H2) and d3.shape == (B, H3)
    assert jnp.allclose(d1.astype(jnp.float32), r1, atol=5e-2, rtol=5e-2)
    assert jnp.allclose(d2.astype(jnp.float32), r2, atol=5e-2, rtol=5e-2)
    assert jnp.allclose(d3.astype(jnp.float32), r3, atol=5e-2, rtol=5e-2)

    # Exact-semantics path: f32 I/O end-to-end.
    e1, e2, e3 = jax.block_until_ready(
        pixel_dem_decoder(x1, x2, x3, cond_scalar, params, io_dtype=jnp.float32)
    )
    assert jnp.allclose(e1, r1, atol=1e-4, rtol=1e-4)
    assert jnp.allclose(e2, r2, atol=1e-4, rtol=1e-4)
    assert jnp.allclose(e3, r3, atol=1e-4, rtol=1e-4)

    print("KERNEL_OK")
</pallas_src>

<mosaic_0001>
module attributes {stable_mosaic.version = 11 : i64} {
  func.func @_decoder_kernel(%arg0: i32, %arg1: memref<8x20xbf16, #tpu.memory_space<vmem>>, %arg2: memref<8x5xbf16, #tpu.memory_space<vmem>>, %arg3: memref<8x2xbf16, #tpu.memory_space<vmem>>, %arg4: memref<2x5xf32, #tpu.memory_space<vmem>>, %arg5: memref<1x5xf32, #tpu.memory_space<vmem>>, %arg6: memref<5x20xf32, #tpu.memory_space<vmem>>, %arg7: memref<5x20xf32, #tpu.memory_space<vmem>>, %arg8: memref<1x20xf32, #tpu.memory_space<vmem>>, %arg9: memref<20x128xf32, #tpu.memory_space<vmem>>, %arg10: memref<20x128xf32, #tpu.memory_space<vmem>>, %arg11: memref<1x128xf32, #tpu.memory_space<vmem>>, %arg12: memref<5x128xf32, #tpu.memory_space<vmem>>, %arg13: memref<20x128xf32, #tpu.memory_space<vmem>>, %arg14: memref<8x128xbf16, #tpu.memory_space<vmem>>) attributes {dimension_semantics = [#tpu.dimension_semantics<parallel>], iteration_bounds = array<i64: 1>, scalar_prefetch = 0 : i64, scratch_operands = 0 : i64, tpu.core_type = #tpu.core_type<tc>, window_params = [{transform_indices = @transform_0, window_bounds = array<i64: 8, 20>}, {transform_indices = @transform_1, window_bounds = array<i64: 8, 5>}, {transform_indices = @transform_2, window_bounds = array<i64: 8, 2>}, {pipeline_mode = #tpu.pipeline_mode<synchronous>, transform_indices = @transform_3, window_bounds = array<i64: 2, 5>}, {pipeline_mode = #tpu.pipeline_mode<synchronous>, transform_indices = @transform_4, window_bounds = array<i64: 1, 5>}, {pipeline_mode = #tpu.pipeline_mode<synchronous>, transform_indices = @transform_5, window_bounds = array<i64: 5, 20>}, {pipeline_mode = #tpu.pipeline_mode<synchronous>, transform_indices = @transform_6, window_bounds = array<i64: 5, 20>}, {pipeline_mode = #tpu.pipeline_mode<synchronous>, transform_indices = @transform_7, window_bounds = array<i64: 1, 20>}, {pipeline_mode = #tpu.pipeline_mode<synchronous>, transform_indices = @transform_8, window_bounds = array<i64: 20, 128>}, {pipeline_mode = #tpu.pipeline_mode<synchronous>, transform_indices = @transform_9, window_bounds = array<i64: 20, 128>}, {pipeline_mode = #tpu.pipeline_mode<synchronous>, transform_indices = @transform_10, window_bounds = array<i64: 1, 128>}, {pipeline_mode = #tpu.pipeline_mode<synchronous>, transform_indices = @transform_11, window_bounds = array<i64: 5, 128>}, {pipeline_mode = #tpu.pipeline_mode<synchronous>, transform_indices = @transform_12, window_bounds = array<i64: 20, 128>}, {transform_indices = @transform_13, window_bounds = array<i64: 8, 128>}]} {
    %c0 = arith.constant 0 : index
    %c0_0 = arith.constant 0 : index
    %0 = vector.load %arg1[%c0, %c0_0] : memref<8x20xbf16, #tpu.memory_space<vmem>>, vector<8x20xbf16>
    %1 = arith.extf %0 : vector<8x20xbf16> to vector<8x20xf32>
    %c0_1 = arith.constant 0 : index
    %c0_2 = arith.constant 0 : index
    %2 = vector.load %arg2[%c0_1, %c0_2] : memref<8x5xbf16, #tpu.memory_space<vmem>>, vector<8x5xbf16>
    %3 = arith.extf %2 : vector<8x5xbf16> to vector<8x5xf32>
    %c0_3 = arith.constant 0 : index
    %c0_4 = arith.constant 0 : index
    %4 = vector.load %arg3[%c0_3, %c0_4] : memref<8x2xbf16, #tpu.memory_space<vmem>>, vector<8x2xbf16>
    %5 = arith.extf %4 : vector<8x2xbf16> to vector<8x2xf32>
    %c0_5 = arith.constant 0 : index
    %c0_6 = arith.constant 0 : index
    %6 = vector.load %arg4[%c0_5, %c0_6] : memref<2x5xf32, #tpu.memory_space<vmem>>, vector<2x5xf32>
    %cst = arith.constant dense<0.000000e+00> : vector<8x5xf32>
    %7 = tpu.matmul %5, %6, %cst {dimension_numbers = #tpu.dot_dimension_numbers<[1], [0], [0], [1], [0, 0, 1, 1], [], []>} : vector<8x2xf32>, vector<2x5xf32>, vector<8x5xf32> -> vector<8x5xf32>
    %c0_7 = arith.constant 0 : index
    %c0_8 = arith.constant 0 : index
    %8 = vector.load %arg5[%c0_7, %c0_8] : memref<1x5xf32, #tpu.memory_space<vmem>>, vector<1x5xf32>
    %9 = vector.broadcast %8 : vector<1x5xf32> to vector<8x5xf32>
    %10 = arith.addf %7, %9 : vector<8x5xf32>
    %11 = arith.negf %10 : vector<8x5xf32>
    %12 = math.exp %11 : vector<8x5xf32>
    %cst_9 = arith.constant 1.000000e+00 : f32
    %13 = vector.broadcast %cst_9 : f32 to vector<8x5xf32>
    %14 = arith.addf %13, %12 : vector<8x5xf32>
    %15 = arith.divf %13, %14 : vector<8x5xf32>
    %16 = arith.mulf %10, %15 : vector<8x5xf32>
    %c0_10 = arith.constant 0 : index
    %c0_11 = arith.constant 0 : index
    %17 = vector.load %arg6[%c0_10, %c0_11] : memref<5x20xf32, #tpu.memory_space<vmem>>, vector<5x20xf32>
    %cst_12 = arith.constant dense<0.000000e+00> : vector<8x20xf32>
    %18 = tpu.matmul %16, %17, %cst_12 {dimension_numbers = #tpu.dot_dimension_numbers<[1], [0], [0], [1], [0, 0, 1, 1], [], []>} : vector<8x5xf32>, vector<5x20xf32>, vector<8x20xf32> -> vector<8x20xf32>
    %c0_13 = arith.constant 0 : index
    %c0_14 = arith.constant 0 : index
    %19 = vector.load %arg7[%c0_13, %c0_14] : memref<5x20xf32, #tpu.memory_space<vmem>>, vector<5x20xf32>
    %cst_15 = arith.constant dense<0.000000e+00> : vector<8x20xf32>
    %20 = tpu.matmul %3, %19, %cst_15 {dimension_numbers = #tpu.dot_dimension_numbers<[1], [0], [0], [1], [0, 0, 1, 1], [], []>} : vector<8x5xf32>, vector<5x20xf32>, vector<8x20xf32> -> vector<8x20xf32>
    %21 = arith.addf %18, %20 : vector<8x20xf32>
    %c0_16 = arith.constant 0 : index
    %c0_17 = arith.constant 0 : index
    %22 = vector.load %arg8[%c0_16, %c0_17] : memref<1x20xf32, #tpu.memory_space<vmem>>, vector<1x20xf32>
    %23 = vector.broadcast %22 : vector<1x20xf32> to vector<8x20xf32>
    %24 = arith.addf %21, %23 : vector<8x20xf32>
    %25 = arith.negf %24 : vector<8x20xf32>
    %26 = math.exp %25 : vector<8x20xf32>
    %cst_18 = arith.constant 1.000000e+00 : f32
    %27 = vector.broadcast %cst_18 : f32 to vector<8x20xf32>
    %28 = arith.addf %27, %26 : vector<8x20xf32>
    %29 = arith.divf %27, %28 : vector<8x20xf32>
    %30 = arith.mulf %24, %29 : vector<8x20xf32>
    %c0_19 = arith.constant 0 : index
    %c0_20 = arith.constant 0 : index
    %31 = vector.load %arg9[%c0_19, %c0_20] : memref<20x128xf32, #tpu.memory_space<vmem>>, vector<20x128xf32>
    %cst_21 = arith.constant dense<0.000000e+00> : vector<8x128xf32>
    %32 = tpu.matmul %30, %31, %cst_21 {dimension_numbers = #tpu.dot_dimension_numbers<[1], [0], [0], [1], [0, 0, 1, 1], [], []>} : vector<8x20xf32>, vector<20x128xf32>, vector<8x128xf32> -> vector<8x128xf32>
    %c0_22 = arith.constant 0 : index
    %c0_23 = arith.constant 0 : index
    %33 = vector.load %arg10[%c0_22, %c0_23] : memref<20x128xf32, #tpu.memory_space<vmem>>, vector<20x128xf32>
    %cst_24 = arith.constant dense<0.000000e+00> : vector<8x128xf32>
    %34 = tpu.matmul %1, %33, %cst_24 {dimension_numbers = #tpu.dot_dimension_numbers<[1], [0], [0], [1], [0, 0, 1, 1], [], []>} : vector<8x20xf32>, vector<20x128xf32>, vector<8x128xf32> -> vector<8x128xf32>
    %35 = arith.addf %32, %34 : vector<8x128xf32>
    %c0_25 = arith.constant 0 : index
    %c0_26 = arith.constant 0 : index
    %36 = vector.load %arg11[%c0_25, %c0_26] : memref<1x128xf32, #tpu.memory_space<vmem>>, vector<1x128xf32>
    %37 = vector.broadcast %36 : vector<1x128xf32> to vector<8x128xf32>
    %38 = arith.addf %35, %37 : vector<8x128xf32>
    %c0_27 = arith.constant 0 : index
    %c0_28 = arith.constant 0 : index
    %39 = vector.load %arg12[%c0_27, %c0_28] : memref<5x128xf32, #tpu.memory_space<vmem>>, vector<5x128xf32>
    %cst_29 = arith.constant dense<0.000000e+00> : vector<8x128xf32>
    %40 = tpu.matmul %16, %39, %cst_29 {dimension_numbers = #tpu.dot_dimension_numbers<[1], [0], [0], [1], [0, 0, 1, 1], [], []>} : vector<8x5xf32>, vector<5x128xf32>, vector<8x128xf32> -> vector<8x128xf32>
    %c0_30 = arith.constant 0 : index
    %c0_31 = arith.constant 0 : index
    %41 = vector.load %arg13[%c0_30, %c0_31] : memref<20x128xf32, #tpu.memory_space<vmem>>, vector<20x128xf32>
    %cst_32 = arith.constant dense<0.000000e+00> : vector<8x128xf32>
    %42 = tpu.matmul %30, %41, %cst_32 {dimension_numbers = #tpu.dot_dimension_numbers<[1], [0], [0], [1], [0, 0, 1, 1], [], []>} : vector<8x20xf32>, vector<20x128xf32>, vector<8x128xf32> -> vector<8x128xf32>
    %43 = arith.addf %40, %42 : vector<8x128xf32>
    %44 = arith.addf %43, %38 : vector<8x128xf32>
    %45 = arith.truncf %44 : vector<8x128xf32> to vector<8x128xbf16>
    %c0_33 = arith.constant 0 : index
    %c0_34 = arith.constant 0 : index
    %46 = vector.load %arg14[%c0_33, %c0_34] : memref<8x128xbf16, #tpu.memory_space<vmem>>, vector<8x128xbf16>
    tpu.vector_store %arg14[%c0_33, %c0_34], %45 {strides = array<i32>} : memref<8x128xbf16, #tpu.memory_space<vmem>>, vector<8x128xbf16>,
    return
  }
  func.func @transform_0(%arg0: i32) -> (i32, i32) {
    %c0_i32 = arith.constant 0 : i32
    %c0_i32_0 = arith.constant 0 : i32
    return %arg0, %c0_i32 : i32, i32
  }
  func.func @transform_1(%arg0: i32) -> (i32, i32) {
    %c0_i32 = arith.constant 0 : i32
    %c0_i32_0 = arith.constant 0 : i32
    return %arg0, %c0_i32 : i32, i32
  }
  func.func @transform_2(%arg0: i32) -> (i32, i32) {
    %c0_i32 = arith.constant 0 : i32
    %c0_i32_0 = arith.constant 0 : i32
    return %arg0, %c0_i32 : i32, i32
  }
  func.func @transform_3(%arg0: i32) -> (i32, i32) {
    %c0_i32 = arith.constant 0 : i32
    %c0_i32_0 = arith.constant 0 : i32
    %c0_i32_1 = arith.constant 0 : i32
    return %c0_i32, %c0_i32_0 : i32, i32
  }
  func.func @transform_4(%arg0: i32) -> (i32, i32) {
    %c0_i32 = arith.constant 0 : i32
    %c0_i32_0 = arith.constant 0 : i32
    %c0_i32_1 = arith.constant 0 : i32
    return %c0_i32, %c0_i32_0 : i32, i32
  }
  func.func @transform_5(%arg0: i32) -> (i32, i32) {
    %c0_i32 = arith.constant 0 : i32
    %c0_i32_0 = arith.constant 0 : i32
    %c0_i32_1 = arith.constant 0 : i32
    return %c0_i32, %c0_i32_0 : i32, i32
  }
  func.func @transform_6(%arg0: i32) -> (i32, i32) {
    %c0_i32 = arith.constant 0 : i32
    %c0_i32_0 = arith.constant 0 : i32
    %c0_i32_1 = arith.constant 0 : i32
    return %c0_i32, %c0_i32_0 : i32, i32
  }
  func.func @transform_7(%arg0: i32) -> (i32, i32) {
    %c0_i32 = arith.constant 0 : i32
    %c0_i32_0 = arith.constant 0 : i32
    %c0_i32_1 = arith.constant 0 : i32
    return %c0_i32, %c0_i32_0 : i32, i32
  }
  func.func @transform_8(%arg0: i32) -> (i32, i32) {
    %c0_i32 = arith.constant 0 : i32
    %c0_i32_0 = arith.constant 0 : i32
    %c0_i32_1 = arith.constant 0 : i32
    return %c0_i32, %c0_i32_0 : i32, i32
  }
  func.func @transform_9(%arg0: i32) -> (i32, i32) {
    %c0_i32 = arith.constant 0 : i32
    %c0_i32_0 = arith.constant 0 : i32
    %c0_i32_1 = arith.constant 0 : i32
    return %c0_i32, %c0_i32_0 : i32, i32
  }
  func.func @transform_10(%arg0: i32) -> (i32, i32) {
    %c0_i32 = arith.constant 0 : i32
    %c0_i32_0 = arith.constant 0 : i32
    %c0_i32_1 = arith.constant 0 : i32
    return %c0_i32, %c0_i32_0 : i32, i32
  }
  func.func @transform_11(%arg0: i32) -> (i32, i32) {
    %c0_i32 = arith.constant 0 : i32
    %c0_i32_0 = arith.constant 0 : i32
    %c0_i32_1 = arith.constant 0 : i32
    return %c0_i32, %c0_i32_0 : i32, i32
  }
  func.func @transform_12(%arg0: i32) -> (i32, i32) {
    %c0_i32 = arith.constant 0 : i32
    %c0_i32_0 = arith.constant 0 : i32
    %c0_i32_1 = arith.constant 0 : i32
    return %c0_i32, %c0_i32_0 : i32, i32
  }
  func.func @transform_13(%arg0: i32) -> (i32, i32) {
    %c0_i32 = arith.constant 0 : i32
    %c0_i32_0 = arith.constant 0 : i32
    return %arg0, %c0_i32 : i32, i32
  }
}

</mosaic_0001>

<llo_original>
// kernel: tpu_custom_call.1
$region0: #{tpu_custom_call.1}
  #allocation0 [shape = 'u32[]', space=smem, size = 0x4, offset = 0x4, fixed_abs, tag = 'smem constant byte address 0x4 - core index']
  #allocation1 [shape = 'u32[144,128]{1,0:T(1,128)}', space=vmem, size = 0x12000, scoped, tag = 'internal scratch']
  %s0 = inlined_call_operand.hbm [shape: bf16[8,20], index: 0, kind: input, shape index: {}]
  %s1 = inlined_call_operand.hbm [shape: bf16[8,5], index: 1, kind: input, shape index: {}]
  %s2 = inlined_call_operand.vmem [shape: bf16[8,2], index: 2, kind: input, shape index: {}]
  %s3 = inlined_call_operand.vmem [shape: f32[2,5], index: 3, kind: input, shape index: {}]
  %s4 = inlined_call_operand.hbm [shape: f32[1,5], index: 4, kind: input, shape index: {}]
  %s5 = inlined_call_operand.hbm [shape: f32[5,20], index: 5, kind: input, shape index: {}]
  %s6 = inlined_call_operand.hbm [shape: f32[5,20], index: 6, kind: input, shape index: {}]
  %s7 = inlined_call_operand.hbm [shape: f32[1,20], index: 7, kind: input, shape index: {}]
  %s8 = inlined_call_operand.vmem [shape: f32[20,128], index: 8, kind: input, shape index: {}]
  %s9 = inlined_call_operand.hbm [shape: f32[20,128], index: 9, kind: input, shape index: {}]
  %s10 = inlined_call_operand.hbm [shape: f32[1,128], index: 10, kind: input, shape index: {}]
  %s11 = inlined_call_operand.hbm [shape: f32[5,128], index: 11, kind: input, shape index: {}]
  %s12 = inlined_call_operand.vmem [shape: f32[20,128], index: 12, kind: input, shape index: {}]
  %s13 = inlined_call_operand.hbm [shape: bf16[8,128], index: 13, kind: output, shape index: {}]
  %s14 = sld [smem:[#allocation0]]
  $region98: #{tpu_custom_call.1} parent=0
    _
  %s16 = ssub.s32 1, %s14
  %s17 = scalar_select 0, %s16, %s14
  $region1: #{tpu_custom_call.1} parent=0
    #allocation2 [shape = 'u8[2048]{0}', space=vmem, size = 0x800, scoped, tag = 'input window, operand 0, single buffered']
    #allocation3 [shape = 's32[1]{0}', space=sflag, size = 0x4, scoped, tag = 'scoped memory for tpu_custom_call.1']
    #allocation4 [shape = 's32[1]{0}', space=sflag, size = 0x4, scoped, tag = 'scoped memory for tpu_custom_call.1']
    #allocation5 [shape = 'u8[2048]{0}', space=vmem, size = 0x800, scoped, tag = 'input window, operand 1, single buffered']
    #allocation6 [shape = 's32[1]{0}', space=sflag, size = 0x4, scoped, tag = 'scoped memory for tpu_custom_call.1']
    #allocation7 [shape = 'u8[512]{0}', space=vmem, size = 0x400, scoped, tag = 'input window, operand 4, single buffered']
    #allocation8 [shape = 'u8[4096]{0}', space=vmem, size = 0x1000, scoped, tag = 'input window, operand 5, single buffered']
    #allocation9 [shape = 's32[1]{0}', space=sflag, size = 0x4, scoped, tag = 'scoped memory for tpu_custom_call.1']
    #allocation10 [shape = 'u8[4096]{0}', space=vmem, size = 0x1000, scoped, tag = 'input window, operand 6, single buffered']
    #allocation11 [shape = 'u8[512]{0}', space=vmem, size = 0x400, scoped, tag = 'input window, operand 7, single buffered']
    #allocation12 [shape = 's32[1]{0}', space=sflag, size = 0x4, scoped, tag = 'scoped memory for tpu_custom_call.1']
    #allocation13 [shape = 'u8[12288]{0}', space=vmem, size = 0x3000, scoped, tag = 'input window, operand 9, single buffered']
    #allocation14 [shape = 'u8[512]{0}', space=vmem, size = 0x400, scoped, tag = 'input window, operand 10, single buffered']
    #allocation15 [shape = 's32[1]{0}', space=sflag, size = 0x4, scoped, tag = 'scoped memory for tpu_custom_call.1']
    #allocation16 [shape = 'u8[4096]{0}', space=vmem, size = 0x1000, scoped, tag = 'input window, operand 11, single buffered']
    #allocation17 [shape = 'u8[2048]{0}', space=vmem, size = 0x800, scoped, tag = 'output window, operand 0, single buffered']
    %18 = vsyncpa [#allocation3], 0
    %19 = vsyncpa [#allocation6], 0
    %20 = vsyncpa [#allocation9], 0
    %21 = vsyncpa [#allocation12], 0
    %22 = vsyncpa [#allocation15], 0
    %23 = vsyncpa [#allocation4], 0
    // Predicated region
    $region2: #{tpu_custom_call.1} parent=1 // pred_check
      _
    $region3: #{tpu_custom_call.1} parent=1 // pred_check_branch
      %25 = sbr.rel (0) target = $region5
    $region4: #{tpu_custom_call.1} parent=1 // pred_region
      %s27 = ssub.s32 64, 64
      %28 = vsyncadd [#allocation3], %s27
      %s30 = sshll.u32 [#allocation2], 4
      %s31 = int_to_ptr.vmem [resolvable:$true] %s30
      %33 = dma.hbm_to_vmem [thread:$0]  %s0, 64, %s31, [#allocation3]
    $region5: #{tpu_custom_call.1} parent=1 // pred_fallthru
      _
    // Predicated region
    $region6: #{tpu_custom_call.1} parent=1 // pred_check
      _
    $region7: #{tpu_custom_call.1} parent=1 // pred_check_branch
      %35 = sbr.rel (0) target = $region9
    $region8: #{tpu_custom_call.1} parent=1 // pred_region
      %s37 = ssub.s32 64, 64
      %38 = vsyncadd [#allocation6], %s37
      %s40 = sshll.u32 [#allocation5], 4
      %s41 = int_to_ptr.vmem [resolvable:$true] %s40
      %43 = dma.hbm_to_vmem [thread:$0]  %s1, 64, %s41, [#allocation6]
    $region9: #{tpu_custom_call.1} parent=1 // pred_fallthru
      _
    // Predicated region
    $region10: #{tpu_custom_call.1} parent=1 // pred_check
      _
    $region11: #{tpu_custom_call.1} parent=1 // pred_check_branch
      %45 = sbr.rel (0) target = $region13
    $region12: #{tpu_custom_call.1} parent=1 // pred_region
      _
    $region13: #{tpu_custom_call.1} parent=1 // pred_fallthru
      _
    // Predicated region
    $region14: #{tpu_custom_call.1} parent=1 // pred_check
      _
    $region15: #{tpu_custom_call.1} parent=1 // pred_check_branch
      %47 = sbr.rel (0) target = $region17
    $region16: #{tpu_custom_call.1} parent=1 // pred_region
      _
    $region17: #{tpu_custom_call.1} parent=1 // pred_fallthru
      _
    // Predicated region
    $region18: #{tpu_custom_call.1} parent=1 // pred_check
      _
    $region19: #{tpu_custom_call.1} parent=1 // pred_check_branch
      %49 = sbr.rel (0) target = $region21
    $region20: #{tpu_custom_call.1} parent=1 // pred_region
      %s51 = ssub.s32 16, 16
      %52 = vsyncadd [#allocation6], %s51
      %s54 = sshll.u32 [#allocation7], 4
      %s55 = int_to_ptr.vmem [resolvable:$true] %s54
      %57 = dma.hbm_to_vmem [thread:$0]  %s4, 16, %s55, [#allocation6]
    $region21: #{tpu_custom_call.1} parent=1 // pred_fallthru
      _
    // Predicated region
    $region22: #{tpu_custom_call.1} parent=1 // pred_check
      _
    $region23: #{tpu_custom_call.1} parent=1 // pred_check_branch
      %59 = sbr.rel (0) target = $region25
    $region24: #{tpu_custom_call.1} parent=1 // pred_region
      %s61 = ssub.s32 128, 128
      %62 = vsyncadd [#allocation9], %s61
      %s64 = sshll.u32 [#allocation8], 4
      %s65 = int_to_ptr.vmem [resolvable:$true] %s64
      %67 = dma.hbm_to_vmem [thread:$0]  %s5, 128, %s65, [#allocation9]
    $region25: #{tpu_custom_call.1} parent=1 // pred_fallthru
      _
    // Predicated region
    $region26: #{tpu_custom_call.1} parent=1 // pred_check
      _
    $region27: #{tpu_custom_call.1} parent=1 // pred_check_branch
      %69 = sbr.rel (0) target = $region29
    $region28: #{tpu_custom_call.1} parent=1 // pred_region
      %s71 = ssub.s32 128, 128
      %72 = vsyncadd [#allocation9], %s71
      %s74 = sshll.u32 [#allocation10], 4
      %s75 = int_to_ptr.vmem [resolvable:$true] %s74
      %77 = dma.hbm_to_vmem [thread:$0]  %s6, 128, %s75, [#allocation9]
    $region29: #{tpu_custom_call.1} parent=1 // pred_fallthru
      _
    // Predicated region
    $region30: #{tpu_custom_call.1} parent=1 // pred_check
      _
    $region31: #{tpu_custom_call.1} parent=1 // pred_check_branch
      %79 = sbr.rel (0) target = $region33
    $region32: #{tpu_custom_call.1} parent=1 // pred_region
      %s81 = ssub.s32 16, 16
      %82 = vsyncadd [#allocation12], %s81
      %s84 = sshll.u32 [#allocation11], 4
      %s85 = int_to_ptr.vmem [resolvable:$true] %s84
      %87 = dma.hbm_to_vmem [thread:$0]  %s7, 16, %s85, [#allocation12]
    $region33: #{tpu_custom_call.1} parent=1 // pred_fallthru
      _
    // Predicated region
    $region34: #{tpu_custom_call.1} parent=1 // pred_check
      _
    $region35: #{tpu_custom_call.1} parent=1 // pred_check_branch
      %89 = sbr.rel (0) target = $region37
    $region36: #{tpu_custom_call.1} parent=1 // pred_region
      _
    $region37: #{tpu_custom_call.1} parent=1 // pred_fallthru
      _
    // Predicated region
    $region38: #{tpu_custom_call.1} parent=1 // pred_check
      _
    $region39: #{tpu_custom_call.1} parent=1 // pred_check_branch
      %91 = sbr.rel (0) target = $region41
    $region40: #{tpu_custom_call.1} parent=1 // pred_region
      %s93 = ssub.s32 384, 384
      %94 = vsyncadd [#allocation12], %s93
      %s95 = sshll.u32 [#allocation13], 4
      %s96 = int_to_ptr.vmem [resolvable:$true] %s95
      %101 = dma.hbm_to_vmem [thread:$0]  %s9, 384, %s96, [#allocation12], 128, 128, 8
    $region41: #{tpu_custom_call.1} parent=1 // pred_fallthru
      _
    // Predicated region
    $region42: #{tpu_custom_call.1} parent=1 // pred_check
      _
    $region43: #{tpu_custom_call.1} parent=1 // pred_check_branch
      %103 = sbr.rel (0) target = $region45
    $region44: #{tpu_custom_call.1} parent=1 // pred_region
      %s105 = ssub.s32 16, 16
      %106 = vsyncadd [#allocation15], %s105
      %s108 = sshll.u32 [#allocation14], 4
      %s109 = int_to_ptr.vmem [resolvable:$true] %s108
      %111 = dma.hbm_to_vmem [thread:$0]  %s10, 16, %s109, [#allocation15]
    $region45: #{tpu_custom_call.1} parent=1 // pred_fallthru
      _
    // Predicated region
    $region46: #{tpu_custom_call.1} parent=1 // pred_check
      _
    $region47: #{tpu_custom_call.1} parent=1 // pred_check_branch
      %113 = sbr.rel (0) target = $region49
    $region48: #{tpu_custom_call.1} parent=1 // pred_region
      %s115 = ssub.s32 128, 128
      %116 = vsyncadd [#allocation15], %s115
      %s118 = sshll.u32 [#allocation16], 4
      %s119 = int_to_ptr.vmem [resolvable:$true] %s118
      %121 = dma.hbm_to_vmem [thread:$0]  %s11, 128, %s119, [#allocation15]
    $region49: #{tpu_custom_call.1} parent=1 // pred_fallthru
      _
    // Predicated region
    $region50: #{tpu_custom_call.1} parent=1 // pred_check
      _
    $region51: #{tpu_custom_call.1} parent=1 // pred_check_branch
      %123 = sbr.rel (0) target = $region53
    $region52: #{tpu_custom_call.1} parent=1 // pred_region
      _
    $region53: #{tpu_custom_call.1} parent=1 // pred_fallthru
      _
    // Predicated region
    $region54: #{tpu_custom_call.1} parent=1 // pred_check
      _
    $region55: #{tpu_custom_call.1} parent=1 // pred_check_branch
      %125 = sbr.rel (0) target = $region57
    $region56: #{tpu_custom_call.1} parent=1 // pred_region
      %126 = dma.done [#allocation3], 64
    $region57: #{tpu_custom_call.1} parent=1 // pred_fallthru
      _
    // Predicated region
    $region58: #{tpu_custom_call.1} parent=1 // pred_check
      _
    $region59: #{tpu_custom_call.1} parent=1 // pred_check_branch
      %128 = sbr.rel (0) target = $region61
    $region60: #{tpu_custom_call.1} parent=1 // pred_region
      %129 = dma.done [#allocation6], 64
    $region61: #{tpu_custom_call.1} parent=1 // pred_fallthru
      _
    // Predicated region
    $region62: #{tpu_custom_call.1} parent=1 // pred_check
      _
    $region63: #{tpu_custom_call.1} parent=1 // pred_check_branch
      %131 = sbr.rel (0) target = $region65
    $region64: #{tpu_custom_call.1} parent=1 // pred_region
      %132 = dma.done [#allocation6], 16
    $region65: #{tpu_custom_call.1} parent=1 // pred_fallthru
      _
    // Predicated region
    $region66: #{tpu_custom_call.1} parent=1 // pred_check
      _
    $region67: #{tpu_custom_call.1} parent=1 // pred_check_branch
      %134 = sbr.rel (0) target = $region69
    $region68: #{tpu_custom_call.1} parent=1 // pred_region
      %135 = dma.done [#allocation9], 128
    $region69: #{tpu_custom_call.1} parent=1 // pred_fallthru
      _
    // Predicated region
    $region70: #{tpu_custom_call.1} parent=1 // pred_check
      _
    $region71: #{tpu_custom_call.1} parent=1 // pred_check_branch
      %137 = sbr.rel (0) target = $region73
    $region72: #{tpu_custom_call.1} parent=1 // pred_region
      %138 = dma.done [#allocation9], 128
    $region73: #{tpu_custom_call.1} parent=1 // pred_fallthru
      _
    // Predicated region
    $region74: #{tpu_custom_call.1} parent=1 // pred_check
      _
    $region75: #{tpu_custom_call.1} parent=1 // pred_check_branch
      %140 = sbr.rel (0) target = $region77
    $region76: #{tpu_custom_call.1} parent=1 // pred_region
      %141 = dma.done [#allocation12], 16
    $region77: #{tpu_custom_call.1} parent=1 // pred_fallthru
      _
    // Predicated region
    $region78: #{tpu_custom_call.1} parent=1 // pred_check
      _
    $region79: #{tpu_custom_call.1} parent=1 // pred_check_branch
      %143 = sbr.rel (0) target = $region81
    $region80: #{tpu_custom_call.1} parent=1 // pred_region
      %144 = dma.done [#allocation12], 384
    $region81: #{tpu_custom_call.1} parent=1 // pred_fallthru
      _
    // Predicated region
    $region82: #{tpu_custom_call.1} parent=1 // pred_check
      _
    $region83: #{tpu_custom_call.1} parent=1 // pred_check_branch
      %146 = sbr.rel (0) target = $region85
    $region84: #{tpu_custom_call.1} parent=1 // pred_region
      %147 = dma.done [#allocation15], 16
    $region85: #{tpu_custom_call.1} parent=1 // pred_fallthru
      _
    // Predicated region
    $region86: #{tpu_custom_call.1} parent=1 // pred_check
      _
    $region87: #{tpu_custom_call.1} parent=1 // pred_check_branch
      %149 = sbr.rel (0) target = $region89
    $region88: #{tpu_custom_call.1} parent=1 // pred_region
      %150 = dma.done [#allocation15], 128
    $region89: #{tpu_custom_call.1} parent=1 // pred_fallthru
      _
    %v151 = vld [vmem:[#allocation2] sm:$0xf]
    %v152 = vunpack.c.l.bf16 %v151
    %v153 = vld [vmem:[#allocation5] sm:$0xf]
    %v154 = vunpack.c.l.bf16 %v153
    %v155 = vld [vmem:[%s2] sm:$0xf]
    %v156 = vunpack.c.l.bf16 %v155
    %v157 = vld [vmem:[%s3] sm:$0x3]
    %v158 = vld [vmem:[#allocation7] sm:$0x1]
    %v160 = vlaneseq
    %v161 = vshrl.u32 %v160, 7
    %v162 = vsub.s32 0, %v161
    %v163 = vrot.slane %v158, %v162
    %vm165 = vcmask 15360
    %v167 = vsel %vm165, %v156, 0
    %vm169 = vcmask 1041408
    %v171 = vsel %vm169, %v157, 0
    %173 = vmatprep.subr.mxu0 0.0
    %174 = vmatpush1.msra.mxu0 %v171
    %175 = vmatprep.subr.mxu0 0.0
    %176 = vmatpush1.msra.mxu0 0.0
    %177 = vmatprep.subr.mxu0 0.0
    %178 = vmatpush1.msra.mxu0 0.0
    %179 = vmatprep.subr.mxu0 0.0
    %180 = vmatpush1.msra.mxu0 0.0
    %181 = vmatprep.subr.mxu0 0.0
    %182 = vmatpush1.msra.mxu0 0.0
    %183 = vmatprep.subr.mxu0 0.0
    %184 = vmatpush1.msra.mxu0 0.0
    %185 = vmatprep.subr.mxu0 0.0
    %186 = vmatpush1.msra.mxu0 0.0
    %187 = vmatprep.subr.mxu0 0.0
    %188 = vmatpush1.msra.mxu0 0.0
    %189 = vmatprep.subr.mxu0 0.0
    %190 = vmatpush1.msra.mxu0 0.0
    %191 = vmatprep.subr.mxu0 0.0
    %192 = vmatpush1.msra.mxu0 0.0
    %193 = vmatprep.subr.mxu0 0.0
    %194 = vmatpush1.msra.mxu0 0.0
    %195 = vmatprep.subr.mxu0 0.0
    %196 = vmatpush1.msra.mxu0 0.0
    %197 = vmatprep.subr.mxu0 0.0
    %198 = vmatpush1.msra.mxu0 0.0
    %199 = vmatprep.subr.mxu0 0.0
    %200 = vmatpush1.msra.mxu0 0.0
    %201 = vmatprep.subr.mxu0 0.0
    %202 = vmatpush1.msra.mxu0 0.0
    %203 = vmatprep.subr.mxu0 0.0
    %204 = vmatpush1.msra.mxu0 0.0
    %205 = vmatprep.subr.mxu0 0.0
    %206 = vmatpush1.msra.mxu0 0.0
    %207 = vmatprep.subr.mxu0 0.0
    %208 = vmatpush1.msra.mxu0 0.0
    %209 = vmatprep.subr.mxu0 0.0
    %210 = vmatpush1.msra.mxu0 0.0
    %211 = vmatprep.subr.mxu0 0.0
    %212 = vmatpush1.msra.mxu0 0.0
    %213 = vmatprep.subr.mxu0 0.0
    %214 = vmatpush1.msra.mxu0 0.0
    %215 = vmatprep.subr.mxu0 0.0
    %216 = vmatpush1.msra.mxu0 0.0
    %217 = vmatprep.subr.mxu0 0.0
    %218 = vmatpush1.msra.mxu0 0.0
    %219 = vmatprep.subr.mxu0 0.0
    %220 = vmatpush1.msra.mxu0 0.0
    %221 = vmatprep.subr.mxu0 0.0
    %222 = vmatpush1.msra.mxu0 0.0
    %223 = vmatprep.subr.mxu0 0.0
    %224 = vmatpush1.msra.mxu0 0.0
    %225 = vmatprep.subr.mxu0 0.0
    %226 = vmatpush1.msra.mxu0 0.0
    %227 = vmatprep.subr.mxu0 0.0
    %228 = vmatpush1.msra.mxu0 0.0
    %229 = vmatprep.subr.mxu0 0.0
    %230 = vmatpush1.msra.mxu0 0.0
    %231 = vmatprep.subr.mxu0 0.0
    %232 = vmatpush1.msra.mxu0 0.0
    %233 = vmatprep.subr.mxu0 0.0
    %234 = vmatpush1.msra.mxu0 0.0
    %235 = vmatprep.subr.mxu0 0.0
    %236 = vmatpush1.msra.mxu0 0.0
    %237 = vmatprep.mubr.f32.mxu0 0.0
    %238 = vmatmul.mubr.f32.gmra.mrb[0].mxu0 %v167
    %v239 = vpop.f32.mrb[0].mxu0
    %v240 = vadd.f32 %v163, %v239
    %v241 = vpop.f32.mrb[0].mxu0
    %242 = vdwg.mxu0
    %v243 = vxor.u32 %v240, 2147483648
    %v244 = vmul.f32 %v243, 1.442695
    %v245 = vpow.pop %v244
    %v246 = vadd.f32 %v245, 1.0
    %v247 = vrcp.pop %v246
    %v248 = vmul.f32 1.0, %v247
    %v249 = vmul.f32 %v240, %v248
    %v250 = vld [vmem:[#allocation8] sm:$0x1f]
    %v251 = vld [vmem:[#allocation10] sm:$0x1f]
    %vm252 = vcmask 39936
    %v254 = vsel %vm252, %v154, 0
    %vm256 = vcmask 1044480
    %v258 = vsel %vm256, %v251, 0
    %260 = vmatprep.subr.mxu0 0.0
    %261 = vmatpush1.msra.mxu0 %v258
    %262 = vmatprep.subr.mxu0 0.0
    %263 = vmatpush1.msra.mxu0 0.0
    %264 = vmatprep.subr.mxu0 0.0
    %265 = vmatpush1.msra.mxu0 0.0
    %266 = vmatprep.subr.mxu0 0.0
    %267 = vmatpush1.msra.mxu0 0.0
    %268 = vmatprep.subr.mxu0 0.0
    %269 = vmatpush1.msra.mxu0 0.0
    %270 = vmatprep.subr.mxu0 0.0
    %271 = vmatpush1.msra.mxu0 0.0
    %272 = vmatprep.subr.mxu0 0.0
    %273 = vmatpush1.msra.mxu0 0.0
    %274 = vmatprep.subr.mxu0 0.0
    %275 = vmatpush1.msra.mxu0 0.0
    %276 = vmatprep.subr.mxu0 0.0
    %277 = vmatpush1.msra.mxu0 0.0
    %278 = vmatprep.subr.mxu0 0.0
    %279 = vmatpush1.msra.mxu0 0.0
    %280 = vmatprep.subr.mxu0 0.0
    %281 = vmatpush1.msra.mxu0 0.0
    %282 = vmatprep.subr.mxu0 0.0
    %283 = vmatpush1.msra.mxu0 0.0
    %284 = vmatprep.subr.mxu0 0.0
    %285 = vmatpush1.msra.mxu0 0.0
    %286 = vmatprep.subr.mxu0 0.0
    %287 = vmatpush1.msra.mxu0 0.0
    %288 = vmatprep.subr.mxu0 0.0
    %289 = vmatpush1.msra.mxu0 0.0
    %290 = vmatprep.subr.mxu0 0.0
    %291 = vmatpush1.msra.mxu0 0.0
    %292 = vmatprep.subr.mxu0 0.0
    %293 = vmatpush1.msra.mxu0 0.0
    %294 = vmatprep.subr.mxu0 0.0
    %295 = vmatpush1.msra.mxu0 0.0
    %296 = vmatprep.subr.mxu0 0.0
    %297 = vmatpush1.msra.mxu0 0.0
    %298 = vmatprep.subr.mxu0 0.0
    %299 = vmatpush1.msra.mxu0 0.0
    %300 = vmatprep.subr.mxu0 0.0
    %301 = vmatpush1.msra.mxu0 0.0
    %302 = vmatprep.subr.mxu0 0.0
    %303 = vmatpush1.msra.mxu0 0.0
    %304 = vmatprep.subr.mxu0 0.0
    %305 = vmatpush1.msra.mxu0 0.0
    %306 = vmatprep.subr.mxu0 0.0
    %307 = vmatpush1.msra.mxu0 0.0
    %308 = vmatprep.subr.mxu0 0.0
    %309 = vmatpush1.msra.mxu0 0.0
    %310 = vmatprep.subr.mxu0 0.0
    %311 = vmatpush1.msra.mxu0 0.0
    %312 = vmatprep.subr.mxu0 0.0
    %313 = vmatpush1.msra.mxu0 0.0
    %314 = vmatprep.subr.mxu0 0.0
    %315 = vmatpush1.msra.mxu0 0.0
    %316 = vmatprep.subr.mxu0 0.0
    %317 = vmatpush1.msra.mxu0 0.0
    %318 = vmatprep.subr.mxu0 0.0
    %319 = vmatpush1.msra.mxu0 0.0
    %320 = vmatprep.subr.mxu0 0.0
    %321 = vmatpush1.msra.mxu0 0.0
    %322 = vmatprep.subr.mxu0 0.0
    %323 = vmatpush1.msra.mxu0 0.0
    %324 = vmatprep.mubr.f32.mxu0 0.0
    %325 = vmatmul.mubr.f32.gmra.mrb[0].mxu0 %v254
    %v326 = vpop.f32.mrb[0].mxu0
    %v327 = vadd.f32 0.0, %v326
    %v328 = vpop.f32.mrb[0].mxu0
    %329 = vdwg.mxu0
    %v331 = vsel %vm252, %v249, 0
    %v334 = vsel %vm256, %v250, 0
    %336 = vmatprep.subr.mxu0 0.0
    %337 = vmatpush1.msra.mxu0 %v334
    %338 = vmatprep.subr.mxu0 0.0
    %339 = vmatpush1.msra.mxu0 0.0
    %340 = vmatprep.subr.mxu0 0.0
    %341 = vmatpush1.msra.mxu0 0.0
    %342 = vmatprep.subr.mxu0 0.0
    %343 = vmatpush1.msra.mxu0 0.0
    %344 = vmatprep.subr.mxu0 0.0
    %345 = vmatpush1.msra.mxu0 0.0
    %346 = vmatprep.subr.mxu0 0.0
    %347 = vmatpush1.msra.mxu0 0.0
    %348 = vmatprep.subr.mxu0 0.0
    %349 = vmatpush1.msra.mxu0 0.0
    %350 = vmatprep.subr.mxu0 0.0
    %351 = vmatpush1.msra.mxu0 0.0
    %352 = vmatprep.subr.mxu0 0.0
    %353 = vmatpush1.msra.mxu0 0.0
    %354 = vmatprep.subr.mxu0 0.0
    %355 = vmatpush1.msra.mxu0 0.0
    %356 = vmatprep.subr.mxu0 0.0
    %357 = vmatpush1.msra.mxu0 0.0
    %358 = vmatprep.subr.mxu0 0.0
    %359 = vmatpush1.msra.mxu0 0.0
    %360 = vmatprep.subr.mxu0 0.0
    %361 = vmatpush1.msra.mxu0 0.0
    %362 = vmatprep.subr.mxu0 0.0
    %363 = vmatpush1.msra.mxu0 0.0
    %364 = vmatprep.subr.mxu0 0.0
    %365 = vmatpush1.msra.mxu0 0.0
    %366 = vmatprep.subr.mxu0 0.0
    %367 = vmatpush1.msra.mxu0 0.0
    %368 = vmatprep.subr.mxu0 0.0
    %369 = vmatpush1.msra.mxu0 0.0
    %370 = vmatprep.subr.mxu0 0.0
    %371 = vmatpush1.msra.mxu0 0.0
    %372 = vmatprep.subr.mxu0 0.0
    %373 = vmatpush1.msra.mxu0 0.0
    %374 = vmatprep.subr.mxu0 0.0
    %375 = vmatpush1.msra.mxu0 0.0
    %376 = vmatprep.subr.mxu0 0.0
    %377 = vmatpush1.msra.mxu0 0.0
    %378 = vmatprep.subr.mxu0 0.0
    %379 = vmatpush1.msra.mxu0 0.0
    %380 = vmatprep.subr.mxu0 0.0
    %381 = vmatpush1.msra.mxu0 0.0
    %382 = vmatprep.subr.mxu0 0.0
    %383 = vmatpush1.msra.mxu0 0.0
    %384 = vmatprep.subr.mxu0 0.0
    %385 = vmatpush1.msra.mxu0 0.0
    %386 = vmatprep.subr.mxu0 0.0
    %387 = vmatpush1.msra.mxu0 0.0
    %388 = vmatprep.subr.mxu0 0.0
    %389 = vmatpush1.msra.mxu0 0.0
    %390 = vmatprep.subr.mxu0 0.0
    %391 = vmatpush1.msra.mxu0 0.0
    %392 = vmatprep.subr.mxu0 0.0
    %393 = vmatpush1.msra.mxu0 0.0
    %394 = vmatprep.subr.mxu0 0.0
    %395 = vmatpush1.msra.mxu0 0.0
    %396 = vmatprep.subr.mxu0 0.0
    %397 = vmatpush1.msra.mxu0 0.0
    %398 = vmatprep.subr.mxu0 0.0
    %399 = vmatpush1.msra.mxu0 0.0
    %400 = vmatprep.mubr.f32.mxu0 0.0
    %401 = vmatmul.mubr.f32.gmra.mrb[0].mxu0 %v331
    %v402 = vpop.f32.mrb[0].mxu0
    %v403 = vadd.f32 %v327, %v402
    %v404 = vpop.f32.mrb[0].mxu0
    %405 = vdwg.mxu0
    %v406 = vld [vmem:[#allocation11] sm:$0x1]
    %v408 = vlaneseq
    %v409 = vshrl.u32 %v408, 7
    %v410 = vsub.s32 0, %v409
    %v411 = vrot.slane %v406, %v410
    %v413 = vadd.f32 %v403, %v411
    %v414 = vxor.u32 %v413, 2147483648
    %v415 = vmul.f32 %v414, 1.442695
    %v416 = vpow.pop %v415
    %v417 = vadd.f32 %v416, 1.0
    %v418 = vrcp.pop %v417
    %v419 = vmul.f32 1.0, %v418
    %v420 = vmul.f32 %v413, %v419
    %v421 = vld [vmem:[%s8] sm:$0xff]
    %v422 = vld [vmem:[%s8 + $0x8] sm:$0xff]
    %v423 = vld [vmem:[%s8 + $0x10] sm:$0xf]
    %v424 = vld [vmem:[#allocation13] sm:$0xff]
    %v425 = vld [vmem:[#allocation13 + $0x8] sm:$0xff]
    %v426 = vld [vmem:[#allocation13 + $0x10] sm:$0xf]
    %vm427 = vcmask 162816
    %v429 = vsel %vm427, %v152, 0
    %vm431 = vcmask 1043456
    %v433 = vsel %vm431, %v426, 0
    %435 = vmatprep.subr.mxu0 0.0
    %436 = vmatpush1.msra.mxu0 %v424
    %437 = vmatprep.subr.mxu0 0.0
    %438 = vmatpush1.msra.mxu0 %v425
    %439 = vmatprep.subr.mxu0 0.0
    %440 = vmatpush1.msra.mxu0 %v433
    %441 = vmatprep.subr.mxu0 0.0
    %442 = vmatpush1.msra.mxu0 0.0
    %443 = vmatprep.subr.mxu0 0.0
    %444 = vmatpush1.msra.mxu0 0.0
    %445 = vmatprep.subr.mxu0 0.0
    %446 = vmatpush1.msra.mxu0 0.0
    %447 = vmatprep.subr.mxu0 0.0
    %448 = vmatpush1.msra.mxu0 0.0
    %449 = vmatprep.subr.mxu0 0.0
    %450 = vmatpush1.msra.mxu0 0.0
    %451 = vmatprep.subr.mxu0 0.0
    %452 = vmatpush1.msra.mxu0 0.0
    %453 = vmatprep.subr.mxu0 0.0
    %454 = vmatpush1.msra.mxu0 0.0
    %455 = vmatprep.subr.mxu0 0.0
    %456 = vmatpush1.msra.mxu0 0.0
    %457 = vmatprep.subr.mxu0 0.0
    %458 = vmatpush1.msra.mxu0 0.0
    %459 = vmatprep.subr.mxu0 0.0
    %460 = vmatpush1.msra.mxu0 0.0
    %461 = vmatprep.subr.mxu0 0.0
    %462 = vmatpush1.msra.mxu0 0.0
    %463 = vmatprep.subr.mxu0 0.0
    %464 = vmatpush1.msra.mxu0 0.0
    %465 = vmatprep.subr.mxu0 0.0
    %466 = vmatpush1.msra.mxu0 0.0
    %467 = vmatprep.subr.mxu0 0.0
    %468 = vmatpush1.msra.mxu0 0.0
    %469 = vmatprep.subr.mxu0 0.0
    %470 = vmatpush1.msra.mxu0 0.0
    %471 = vmatprep.subr.mxu0 0.0
    %472 = vmatpush1.msra.mxu0 0.0
    %473 = vmatprep.subr.mxu0 0.0
    %474 = vmatpush1.msra.mxu0 0.0
    %475 = vmatprep.subr.mxu0 0.0
    %476 = vmatpush1.msra.mxu0 0.0
    %477 = vmatprep.subr.mxu0 0.0
    %478 = vmatpush1.msra.mxu0 0.0
    %479 = vmatprep.subr.mxu0 0.0
    %480 = vmatpush1.msra.mxu0 0.0
    %481 = vmatprep.subr.mxu0 0.0
    %482 = vmatpush1.msra.mxu0 0.0
    %483 = vmatprep.subr.mxu0 0.0
    %484 = vmatpush1.msra.mxu0 0.0
    %485 = vmatprep.subr.mxu0 0.0
    %486 = vmatpush1.msra.mxu0 0.0
    %487 = vmatprep.subr.mxu0 0.0
    %488 = vmatpush1.msra.mxu0 0.0
    %489 = vmatprep.subr.mxu0 0.0
    %490 = vmatpush1.msra.mxu0 0.0
    %491 = vmatprep.subr.mxu0 0.0
    %492 = vmatpush1.msra.mxu0 0.0
    %493 = vmatprep.subr.mxu0 0.0
    %494 = vmatpush1.msra.mxu0 0.0
    %495 = vmatprep.subr.mxu0 0.0
    %496 = vmatpush1.msra.mxu0 0.0
    %497 = vmatprep.subr.mxu0 0.0
    %498 = vmatpush1.msra.mxu0 0.0
    %499 = vmatprep.mubr.f32.mxu0 0.0
    %500 = vmatmul.mubr.f32.gmra.mrb[0].mxu0 %v429
    %v501 = vpop.f32.mrb[0].mxu0
    %v502 = vadd.f32 0.0, %v501
    %v503 = vpop.f32.mrb[0].mxu0
    %504 = vdwg.mxu0
    %v506 = vsel %vm427, %v420, 0
    %v509 = vsel %vm431, %v423, 0
    %511 = vmatprep.subr.mxu0 0.0
    %512 = vmatpush1.msra.mxu0 %v421
    %513 = vmatprep.subr.mxu0 0.0
    %514 = vmatpush1.msra.mxu0 %v422
    %515 = vmatprep.subr.mxu0 0.0
    %516 = vmatpush1.msra.mxu0 %v509
    %517 = vmatprep.subr.mxu0 0.0
    %518 = vmatpush1.msra.mxu0 0.0
    %519 = vmatprep.subr.mxu0 0.0
    %520 = vmatpush1.msra.mxu0 0.0
    %521 = vmatprep.subr.mxu0 0.0
    %522 = vmatpush1.msra.mxu0 0.0
    %523 = vmatprep.subr.mxu0 0.0
    %524 = vmatpush1.msra.mxu0 0.0
    %525 = vmatprep.subr.mxu0 0.0
    %526 = vmatpush1.msra.mxu0 0.0
    %527 = vmatprep.subr.mxu0 0.0
    %528 = vmatpush1.msra.mxu0 0.0
    %529 = vmatprep.subr.mxu0 0.0
    %530 = vmatpush1.msra.mxu0 0.0
    %531 = vmatprep.subr.mxu0 0.0
    %532 = vmatpush1.msra.mxu0 0.0
    %533 = vmatprep.subr.mxu0 0.0
    %534 = vmatpush1.msra.mxu0 0.0
    %535 = vmatprep.subr.mxu0 0.0
    %536 = vmatpush1.msra.mxu0 0.0
    %537 = vmatprep.subr.mxu0 0.0
    %538 = vmatpush1.msra.mxu0 0.0
    %539 = vmatprep.subr.mxu0 0.0
    %540 = vmatpush1.msra.mxu0 0.0
    %541 = vmatprep.subr.mxu0 0.0
    %542 = vmatpush1.msra.mxu0 0.0
    %543 = vmatprep.subr.mxu0 0.0
    %544 = vmatpush1.msra.mxu0 0.0
    %545 = vmatprep.subr.mxu0 0.0
    %546 = vmatpush1.msra.mxu0 0.0
    %547 = vmatprep.subr.mxu0 0.0
    %548 = vmatpush1.msra.mxu0 0.0
    %549 = vmatprep.subr.mxu0 0.0
    %550 = vmatpush1.msra.mxu0 0.0
    %551 = vmatprep.subr.mxu0 0.0
    %552 = vmatpush1.msra.mxu0 0.0
    %553 = vmatprep.subr.mxu0 0.0
    %554 = vmatpush1.msra.mxu0 0.0
    %555 = vmatprep.subr.mxu0 0.0
    %556 = vmatpush1.msra.mxu0 0.0
    %557 = vmatprep.subr.mxu0 0.0
    %558 = vmatpush1.msra.mxu0 0.0
    %559 = vmatprep.subr.mxu0 0.0
    %560 = vmatpush1.msra.mxu0 0.0
    %561 = vmatprep.subr.mxu0 0.0
    %562 = vmatpush1.msra.mxu0 0.0
    %563 = vmatprep.subr.mxu0 0.0
    %564 = vmatpush1.msra.mxu0 0.0
    %565 = vmatprep.subr.mxu0 0.0
    %566 = vmatpush1.msra.mxu0 0.0
    %567 = vmatprep.subr.mxu0 0.0
    %568 = vmatpush1.msra.mxu0 0.0
    %569 = vmatprep.subr.mxu0 0.0
    %570 = vmatpush1.msra.mxu0 0.0
    %571 = vmatprep.subr.mxu0 0.0
    %572 = vmatpush1.msra.mxu0 0.0
    %573 = vmatprep.subr.mxu0 0.0
    %574 = vmatpush1.msra.mxu0 0.0
    %575 = vmatprep.mubr.f32.mxu0 0.0
    %576 = vmatmul.mubr.f32.gmra.mrb[0].mxu0 %v506
    %v577 = vpop.f32.mrb[0].mxu0
    %v578 = vadd.f32 %v502, %v577
    %v579 = vpop.f32.mrb[0].mxu0
    %580 = vdwg.mxu0
    %v581 = vld [vmem:[#allocation14] sm:$0x1]
    %v583 = vlaneseq
    %v584 = vshrl.u32 %v583, 7
    %v585 = vsub.s32 0, %v584
    %v586 = vrot.slane %v581, %v585
    %v588 = vadd.f32 %v578, %v586
    %v589 = vld [vmem:[#allocation16] sm:$0x1f]
    %v590 = vld [vmem:[%s12] sm:$0xff]
    %v591 = vld [vmem:[%s12 + $0x8] sm:$0xff]
    %v592 = vld [vmem:[%s12 + $0x10] sm:$0xf]
    %v594 = vsel %vm431, %v592, 0
    %596 = vmatprep.subr.mxu0 0.0
    %597 = vmatpush1.msra.mxu0 %v590
    %598 = vmatprep.subr.mxu0 0.0
    %599 = vmatpush1.msra.mxu0 %v591
    %600 = vmatprep.subr.mxu0 0.0
    %601 = vmatpush1.msra.mxu0 %v594
    %602 = vmatprep.subr.mxu0 0.0
    %603 = vmatpush1.msra.mxu0 0.0
    %604 = vmatprep.subr.mxu0 0.0
    %605 = vmatpush1.msra.mxu0 0.0
    %606 = vmatprep.subr.mxu0 0.0
    %607 = vmatpush1.msra.mxu0 0.0
    %608 = vmatprep.subr.mxu0 0.0
    %609 = vmatpush1.msra.mxu0 0.0
    %610 = vmatprep.subr.mxu0 0.0
    %611 = vmatpush1.msra.mxu0 0.0
    %612 = vmatprep.subr.mxu0 0.0
    %613 = vmatpush1.msra.mxu0 0.0
    %614 = vmatprep.subr.mxu0 0.0
    %615 = vmatpush1.msra.mxu0 0.0
    %616 = vmatprep.subr.mxu0 0.0
    %617 = vmatpush1.msra.mxu0 0.0
    %618 = vmatprep.subr.mxu0 0.0
    %619 = vmatpush1.msra.mxu0 0.0
    %620 = vmatprep.subr.mxu0 0.0
    %621 = vmatpush1.msra.mxu0 0.0
    %622 = vmatprep.subr.mxu0 0.0
    %623 = vmatpush1.msra.mxu0 0.0
    %624 = vmatprep.subr.mxu0 0.0
    %625 = vmatpush1.msra.mxu0 0.0
    %626 = vmatprep.subr.mxu0 0.0
    %627 = vmatpush1.msra.mxu0 0.0
    %628 = vmatprep.subr.mxu0 0.0
    %629 = vmatpush1.msra.mxu0 0.0
    %630 = vmatprep.subr.mxu0 0.0
    %631 = vmatpush1.msra.mxu0 0.0
    %632 = vmatprep.subr.mxu0 0.0
    %633 = vmatpush1.msra.mxu0 0.0
    %634 = vmatprep.subr.mxu0 0.0
    %635 = vmatpush1.msra.mxu0 0.0
    %636 = vmatprep.subr.mxu0 0.0
    %637 = vmatpush1.msra.mxu0 0.0
    %638 = vmatprep.subr.mxu0 0.0
    %639 = vmatpush1.msra.mxu0 0.0
    %640 = vmatprep.subr.mxu0 0.0
    %641 = vmatpush1.msra.mxu0 0.0
    %642 = vmatprep.subr.mxu0 0.0
    %643 = vmatpush1.msra.mxu0 0.0
    %644 = vmatprep.subr.mxu0 0.0
    %645 = vmatpush1.msra.mxu0 0.0
    %646 = vmatprep.subr.mxu0 0.0
    %647 = vmatpush1.msra.mxu0 0.0
    %648 = vmatprep.subr.mxu0 0.0
    %649 = vmatpush1.msra.mxu0 0.0
    %650 = vmatprep.subr.mxu0 0.0
    %651 = vmatpush1.msra.mxu0 0.0
    %652 = vmatprep.subr.mxu0 0.0
    %653 = vmatpush1.msra.mxu0 0.0
    %654 = vmatprep.subr.mxu0 0.0
    %655 = vmatpush1.msra.mxu0 0.0
    %656 = vmatprep.subr.mxu0 0.0
    %657 = vmatpush1.msra.mxu0 0.0
    %658 = vmatprep.subr.mxu0 0.0
    %659 = vmatpush1.msra.mxu0 0.0
    %660 = vmatprep.mubr.f32.mxu0 0.0
    %661 = vmatmul.mubr.f32.gmra.mrb[0].mxu0 %v506
    %v662 = vpop.f32.mrb[0].mxu0
    %v663 = vadd.f32 0.0, %v662
    %v664 = vpop.f32.mrb[0].mxu0
    %665 = vdwg.mxu0
    %v667 = vsel %vm256, %v589, 0
    %669 = vmatprep.subr.mxu0 0.0
    %670 = vmatpush1.msra.mxu0 %v667
    %671 = vmatprep.subr.mxu0 0.0
    %672 = vmatpush1.msra.mxu0 0.0
    %673 = vmatprep.subr.mxu0 0.0
    %674 = vmatpush1.msra.mxu0 0.0
    %675 = vmatprep.subr.mxu0 0.0
    %676 = vmatpush1.msra.mxu0 0.0
    %677 = vmatprep.subr.mxu0 0.0
    %678 = vmatpush1.msra.mxu0 0.0
    %679 = vmatprep.subr.mxu0 0.0
    %680 = vmatpush1.msra.mxu0 0.0
    %681 = vmatprep.subr.mxu0 0.0
    %682 = vmatpush1.msra.mxu0 0.0
    %683 = vmatprep.subr.mxu0 0.0
    %684 = vmatpush1.msra.mxu0 0.0
    %685 = vmatprep.subr.mxu0 0.0
    %686 = vmatpush1.msra.mxu0 0.0
    %687 = vmatprep.subr.mxu0 0.0
    %688 = vmatpush1.msra.mxu0 0.0
    %689 = vmatprep.subr.mxu0 0.0
    %690 = vmatpush1.msra.mxu0 0.0
    %691 = vmatprep.subr.mxu0 0.0
    %692 = vmatpush1.msra.mxu0 0.0
    %693 = vmatprep.subr.mxu0 0.0
    %694 = vmatpush1.msra.mxu0 0.0
    %695 = vmatprep.subr.mxu0 0.0
    %696 = vmatpush1.msra.mxu0 0.0
    %697 = vmatprep.subr.mxu0 0.0
    %698 = vmatpush1.msra.mxu0 0.0
    %699 = vmatprep.subr.mxu0 0.0
    %700 = vmatpush1.msra.mxu0 0.0
    %701 = vmatprep.subr.mxu0 0.0
    %702 = vmatpush1.msra.mxu0 0.0
    %703 = vmatprep.subr.mxu0 0.0
    %704 = vmatpush1.msra.mxu0 0.0
    %705 = vmatprep.subr.mxu0 0.0
    %706 = vmatpush1.msra.mxu0 0.0
    %707 = vmatprep.subr.mxu0 0.0
    %708 = vmatpush1.msra.mxu0 0.0
    %709 = vmatprep.subr.mxu0 0.0
    %710 = vmatpush1.msra.mxu0 0.0
    %711 = vmatprep.subr.mxu0 0.0
    %712 = vmatpush1.msra.mxu0 0.0
    %713 = vmatprep.subr.mxu0 0.0
    %714 = vmatpush1.msra.mxu0 0.0
    %715 = vmatprep.subr.mxu0 0.0
    %716 = vmatpush1.msra.mxu0 0.0
    %717 = vmatprep.subr.mxu0 0.0
    %718 = vmatpush1.msra.mxu0 0.0
    %719 = vmatprep.subr.mxu0 0.0
    %720 = vmatpush1.msra.mxu0 0.0
    %721 = vmatprep.subr.mxu0 0.0
    %722 = vmatpush1.msra.mxu0 0.0
    %723 = vmatprep.subr.mxu0 0.0
    %724 = vmatpush1.msra.mxu0 0.0
    %725 = vmatprep.subr.mxu0 0.0
    %726 = vmatpush1.msra.mxu0 0.0
    %727 = vmatprep.subr.mxu0 0.0
    %728 = vmatpush1.msra.mxu0 0.0
    %729 = vmatprep.subr.mxu0 0.0
    %730 = vmatpush1.msra.mxu0 0.0
    %731 = vmatprep.subr.mxu0 0.0
    %732 = vmatpush1.msra.mxu0 0.0
    %733 = vmatprep.mubr.f32.mxu0 0.0
    %734 = vmatmul.mubr.f32.gmra.mrb[0].mxu0 %v331
    %v735 = vpop.f32.mrb[0].mxu0
    %v736 = vadd.f32 %v663, %v735
    %v737 = vpop.f32.mrb[0].mxu0
    %738 = vdwg.mxu0
    %v739 = vadd.f32 %v736, %v588
    %v740 = vpack.c.bf16 %v739, %v739
    %741 = vst [vmem:[#allocation17] sm:$0xf] %v740
    // Predicated region
    $region90: #{tpu_custom_call.1} parent=1 // pred_check
      _
    $region91: #{tpu_custom_call.1} parent=1 // pred_check_branch
      %743 = sbr.rel (0) target = $region93
    $region92: #{tpu_custom_call.1} parent=1 // pred_region
      %s745 = ssub.s32 64, 64
      %746 = vsyncadd [#allocation4], %s745
      %s748 = sshll.u32 [#allocation17], 4
      %s749 = int_to_ptr.vmem [resolvable:$true] %s748
      %751 = dma.vmem_to_hbm [thread:$0]  %s749, 64, %s13, [#allocation4]
    $region93: #{tpu_custom_call.1} parent=1 // pred_fallthru
      _
    // Predicated region
    $region94: #{tpu_custom_call.1} parent=1 // pred_check
      _
    $region95: #{tpu_custom_call.1} parent=1 // pred_check_branch
      %753 = sbr.rel (0) target = $region97
    $region96: #{tpu_custom_call.1} parent=1 // pred_region
      %754 = dma.done [#allocation4], 64
    $region97: #{tpu_custom_call.1} parent=1 // pred_fallthru
      _
    %755 = vsyncpa [#allocation3], 1
    %756 = vsyncpa [#allocation6], 1
    %757 = vsyncpa [#allocation9], 1
    %758 = vsyncpa [#allocation12], 1
    %759 = vsyncpa [#allocation15], 1
    %760 = vsyncpa [#allocation4], 1

</llo_original>
